<compile_context>
chip_gen: v6e
topology: v6e:2x2x1
jax: 0.10.0
libtpu: 0.0.40
codegen_flags: <defaults>
</compile_context>

<pallas_src>
import math
import functools

import jax
import jax.numpy as jnp
from jax.experimental import pallas as pl
from jax.experimental.pallas import tpu as pltpu


def _rpb_kernel(n_ref, wt_ref, o_ref, *, bidirectional, num_buckets,
                max_distance):
    """One grid step = one q-tile, all heads at once.

    n_ref : (1, TQ*klen) int32   relative distance n = context_pos - memory_pos
    wt_ref: (n_heads, num_buckets) f32   transposed embedding table
    o_ref : (n_heads, TQ*klen) f32
    """
    n = n_ref[...]

    nb = num_buckets
    if bidirectional:
        nb = num_buckets // 2
        ret = (n < 0).astype(jnp.int32) * nb
        n = jnp.abs(n)
    else:
        ret = jnp.zeros_like(n)
        n = jnp.maximum(n, 0)

    max_exact = nb // 2
    is_small = n < max_exact
    # clamp to >=1 inside log; those lanes are masked by is_small anyway
    n_f = jnp.maximum(n, 1).astype(jnp.float32)
    val_if_large = max_exact + (
        jnp.log(n_f / max_exact)
        / math.log(max_distance / max_exact)
        * (nb - max_exact)
    ).astype(jnp.int32)                 # trunc toward zero == torch .to(long)
    val_if_large = jnp.minimum(val_if_large, nb - 1)
    bucket = ret + jnp.where(is_small, n, val_if_large)      # (1, TQ*klen)

    # One-hot over buckets, built once and shared by all heads.
    b_iota = jax.lax.broadcasted_iota(
        jnp.int32, (num_buckets,) + bucket.shape[1:], 0)
    onehot = (b_iota == bucket).astype(jnp.float32)          # (nb, TQ*klen)

    # Embedding lookup for every head in one MXU matmul:
    #   (n_heads, num_buckets) @ (num_buckets, TQ*klen) -> (n_heads, TQ*klen)
    # f32 operands + HIGHEST precision keep this equal to the f32 gather.
    o_ref[...] = jax.lax.dot_general(
        wt_ref[...], onehot,
        dimension_numbers=(((1,), (0,)), ((), ())),
        preferred_element_type=jnp.float32,
        precision=jax.lax.Precision.HIGHEST,
    )


def _choose_q_tile(qlen, klen, n_heads, num_buckets,
                   max_block_bytes=4 * 1024 * 1024):
    """Largest q-tile whose VMEM working set (output block + one-hot +
    bucket rows) stays under max_block_bytes; the flat lane width must be a
    multiple of 128 unless a single block covers the whole array."""
    def bytes_for(tq):
        return 4 * tq * klen * (n_heads + num_buckets + 4)
    if bytes_for(qlen) <= max_block_bytes:
        return qlen                               # single block, grid of 1
    for tq in range(qlen - 1, 0, -1):
        if (qlen % tq == 0 and (tq * klen) % 128 == 0
                and bytes_for(tq) <= max_block_bytes):
            return tq
    return qlen                                   # fallback: one big block


def compute_bias(weight, qlen, klen, step=0, *, bidirectional=True,
                 num_buckets=32, max_distance=128):
    """Returns the bias as (n_heads, qlen, klen) float32 (no batch copies)."""
    weight = jnp.asarray(weight, jnp.float32)
    n_heads = weight.shape[1]

    # Flat (q-major) relative distance: n[q*klen + k] = (step + q) - k.
    ctx = jnp.arange(step, step + qlen, dtype=jnp.int32)[:, None]
    mem = jnp.arange(klen, dtype=jnp.int32)[None, :]
    n_flat = (ctx - mem).reshape(1, qlen * klen)

    tq = _choose_q_tile(qlen, klen, n_heads, num_buckets)
    grid = (pl.cdiv(qlen, tq),)
    width = tq * klen

    kern = functools.partial(
        _rpb_kernel, bidirectional=bidirectional,
        num_buckets=num_buckets, max_distance=max_distance)

    out_flat = pl.pallas_call(
        kern,
        out_shape=jax.ShapeDtypeStruct((n_heads, qlen * klen), jnp.float32),
        grid=grid,
        in_specs=[
            pl.BlockSpec((1, width), lambda qi: (0, qi)),
            pl.BlockSpec((n_heads, num_buckets), lambda qi: (0, 0)),
        ],
        out_specs=pl.BlockSpec((n_heads, width), lambda qi: (0, qi)),
        compiler_params=pltpu.CompilerParams(
            # q-tiles are fully independent -> shard across v7x's 2 TCs.
            dimension_semantics=("parallel",)),
    )(n_flat, weight.T)

    # (H, q*k) -> (H, q, k) is free: row-major contiguous.
    return out_flat.reshape(n_heads, qlen, klen)


def relative_position_bias(weight, batch_size, qlen, klen, step=None, *,
                           bidirectional=True, num_buckets=32,
                           max_distance=128):
    """Matches RelativePositionBias.forward: (batch_size * n_heads, qlen, klen)
    with batch outer / head inner ordering."""
    step = 0 if step is None else int(step)
    values = compute_bias(weight, qlen, klen, step,
                          bidirectional=bidirectional,
                          num_buckets=num_buckets, max_distance=max_distance)
    n_heads = values.shape[0]
    # .repeat(B,1,1,1).view(-1,q,k): broadcast (not tile) so B identical copies
    # are only materialized if/when a consumer actually needs them.
    return jnp.broadcast_to(
        values[None], (batch_size, n_heads, qlen, klen)).reshape(-1, qlen, klen)


def _reference_bias(weight, batch_size, qlen, klen, step=0, *,
                    bidirectional=True, num_buckets=32, max_distance=128):
    ctx = jnp.arange(step, step + qlen, dtype=jnp.int32)[:, None]
    mem = jnp.arange(klen, dtype=jnp.int32)[None, :]
    n = ctx - mem                       # = -(memory - context)
    nb = num_buckets
    ret = jnp.zeros_like(n)
    if bidirectional:
        nb //= 2
        ret = (n < 0).astype(jnp.int32) * nb
        n = jnp.abs(n)
    else:
        n = jnp.maximum(n, 0)
    max_exact = nb // 2
    is_small = n < max_exact
    vil = max_exact + (
        jnp.log(jnp.maximum(n, 1).astype(jnp.float32) / max_exact)
        / math.log(max_distance / max_exact) * (nb - max_exact)
    ).astype(jnp.int32)
    vil = jnp.minimum(vil, nb - 1)
    bucket = ret + jnp.where(is_small, n, vil)
    vals = weight[bucket]                           # (q, k, H) gather
    vals = jnp.transpose(vals, (2, 0, 1))[None]     # (1, H, q, k)
    return jnp.tile(vals, (batch_size, 1, 1, 1)).reshape(-1, qlen, klen)


if __name__ == "__main__":
    num_buckets, n_heads = 32, 12
    batch_size, qlen, klen = 2, 8, 8

    key = jax.random.PRNGKey(0)
    # nn.Embedding default init ~ N(0, 1)
    weight = jax.random.normal(key, (num_buckets, n_heads), dtype=jnp.float32)

    # Config 1: module defaults (bidirectional, step=None).
    out = jax.block_until_ready(
        relative_position_bias(weight, batch_size, qlen, klen))
    ref = _reference_bias(weight, batch_size, qlen, klen)
    assert out.shape == (batch_size * n_heads, qlen, klen), out.shape
    assert jnp.allclose(out, ref, atol=1e-4, rtol=1e-4), "mismatch (default)"

    # Config 2: rectangular q/k with a decode-style step (exercises the log
    # bucket path and the bidirectional offset).
    out2 = jax.block_until_ready(
        relative_position_bias(weight, 3, 8, 16, step=5))
    ref2 = _reference_bias(weight, 3, 8, 16, step=5)
    assert jnp.allclose(out2, ref2, atol=1e-4, rtol=1e-4), "mismatch (step/rect)"

    # Config 3: causal (bidirectional=False).
    out3 = jax.block_until_ready(
        relative_position_bias(weight, 2, qlen, klen, step=4,
                               bidirectional=False))
    ref3 = _reference_bias(weight, 2, qlen, klen, step=4, bidirectional=False)
    assert jnp.allclose(out3, ref3, atol=1e-4, rtol=1e-4), "mismatch (causal)"

    print("KERNEL_OK")
</pallas_src>

<mosaic_0001>
module attributes {stable_mosaic.version = 11 : i64} {
  func.func @_rpb_kernel(%arg0: i32, %arg1: memref<1x64xi32, #tpu.memory_space<vmem>>, %arg2: memref<12x32xf32, #tpu.memory_space<vmem>>, %arg3: memref<12x64xf32, #tpu.memory_space<vmem>>) attributes {dimension_semantics = [#tpu.dimension_semantics<parallel>], iteration_bounds = array<i64: 1>, scalar_prefetch = 0 : i64, scratch_operands = 0 : i64, tpu.core_type = #tpu.core_type<tc>, window_params = [{transform_indices = @transform_0, window_bounds = array<i64: 1, 64>}, {pipeline_mode = #tpu.pipeline_mode<synchronous>, transform_indices = @transform_1, window_bounds = array<i64: 12, 32>}, {transform_indices = @transform_2, window_bounds = array<i64: 12, 64>}]} {
    %c0 = arith.constant 0 : index
    %c0_0 = arith.constant 0 : index
    %0 = vector.load %arg1[%c0, %c0_0] : memref<1x64xi32, #tpu.memory_space<vmem>>, vector<1x64xi32>
    %c0_i32 = arith.constant 0 : i32
    %1 = vector.broadcast %c0_i32 : i32 to vector<1x64xi32>
    %2 = arith.cmpi slt, %0, %1 : vector<1x64xi32>
    %3 = arith.extui %2 : vector<1x64xi1> to vector<1x64xi32>
    %c16_i32 = arith.constant 16 : i32
    %4 = vector.broadcast %c16_i32 : i32 to vector<1x64xi32>
    %5 = arith.muli %3, %4 : vector<1x64xi32>
    %6 = math.absi %0 : vector<1x64xi32>
    %c8_i32 = arith.constant 8 : i32
    %7 = vector.broadcast %c8_i32 : i32 to vector<1x64xi32>
    %8 = arith.cmpi slt, %6, %7 : vector<1x64xi32>
    %c1_i32 = arith.constant 1 : i32
    %9 = vector.broadcast %c1_i32 : i32 to vector<1x64xi32>
    %10 = arith.maxsi %6, %9 : vector<1x64xi32>
    %11 = arith.sitofp %10 : vector<1x64xi32> to vector<1x64xf32>
    %cst = arith.constant 8.000000e+00 : f32
    %12 = vector.broadcast %cst : f32 to vector<1x64xf32>
    %13 = arith.divf %11, %12 : vector<1x64xf32>
    %14 = math.log %13 : vector<1x64xf32>
    %cst_1 = arith.constant 2.77258873 : f32
    %15 = vector.broadcast %cst_1 : f32 to vector<1x64xf32>
    %16 = arith.divf %14, %15 : vector<1x64xf32>
    %cst_2 = arith.constant 8.000000e+00 : f32
    %17 = vector.broadcast %cst_2 : f32 to vector<1x64xf32>
    %18 = arith.mulf %16, %17 : vector<1x64xf32>
    %19 = arith.fptosi %18 : vector<1x64xf32> to vector<1x64xi32>
    %c8_i32_3 = arith.constant 8 : i32
    %20 = vector.broadcast %c8_i32_3 : i32 to vector<1x64xi32>
    %21 = arith.addi %20, %19 : vector<1x64xi32>
    %c15_i32 = arith.constant 15 : i32
    %22 = vector.broadcast %c15_i32 : i32 to vector<1x64xi32>
    %23 = arith.minsi %21, %22 : vector<1x64xi32>
    %24 = arith.select %8, %6, %23 : vector<1x64xi1>, vector<1x64xi32>
    %25 = arith.addi %5, %24 : vector<1x64xi32>
    %26 = tpu.iota {dimensions = array<i32: 0>} : vector<32x64xi32>
    %27 = vector.broadcast %25 : vector<1x64xi32> to vector<32x64xi32>
    %28 = arith.cmpi eq, %26, %27 : vector<32x64xi32>
    %29 = arith.extui %28 : vector<32x64xi1> to vector<32x64xi32>
    %30 = arith.sitofp %29 : vector<32x64xi32> to vector<32x64xf32>
    %c0_4 = arith.constant 0 : index
    %c0_5 = arith.constant 0 : index
    %31 = vector.load %arg2[%c0_4, %c0_5] : memref<12x32xf32, #tpu.memory_space<vmem>>, vector<12x32xf32>
    %cst_6 = arith.constant dense<0.000000e+00> : vector<12x64xf32>
    %32 = tpu.matmul %31, %30, %cst_6 {dimension_numbers = #tpu.dot_dimension_numbers<[1], [0], [0], [1], [0, 0, 1, 1], [], []>, precision = #tpu.contract_precision<fp32>} : vector<12x32xf32>, vector<32x64xf32>, vector<12x64xf32> -> vector<12x64xf32>
    %c0_7 = arith.constant 0 : index
    %c0_8 = arith.constant 0 : index
    %33 = vector.load %arg3[%c0_7, %c0_8] : memref<12x64xf32, #tpu.memory_space<vmem>>, vector<12x64xf32>
    tpu.vector_store %arg3[%c0_7, %c0_8], %32 {strides = array<i32>} : memref<12x64xf32, #tpu.memory_space<vmem>>, vector<12x64xf32>,
    return
  }
  func.func @transform_0(%arg0: i32) -> (i32, i32) {
    %c0_i32 = arith.constant 0 : i32
    %c0_i32_0 = arith.constant 0 : i32
    return %c0_i32, %arg0 : i32, i32
  }
  func.func @transform_1(%arg0: i32) -> (i32, i32) {
    %c0_i32 = arith.constant 0 : i32
    %c0_i32_0 = arith.constant 0 : i32
    %c0_i32_1 = arith.constant 0 : i32
    return %c0_i32, %c0_i32_0 : i32, i32
  }
  func.func @transform_2(%arg0: i32) -> (i32, i32) {
    %c0_i32 = arith.constant 0 : i32
    %c0_i32_0 = arith.constant 0 : i32
    return %c0_i32, %arg0 : i32, i32
  }
}

</mosaic_0001>

<llo_original>
// kernel: tpu_custom_call.1
$region0: #{tpu_custom_call.1}
  #allocation0 [shape = 'u32[]', space=smem, size = 0x4, offset = 0x4, fixed_abs, tag = 'smem constant byte address 0x4 - core index']
  #allocation1 [shape = 'u32[144,128]{1,0:T(1,128)}', space=vmem, size = 0x12000, scoped, tag = 'internal scratch']
  %s0 = inlined_call_operand.hbm [shape: s32[1,64], index: 0, kind: input, shape index: {}]
  %s1 = inlined_call_operand.hbm [shape: f32[12,32], index: 1, kind: input, shape index: {}]
  %s2 = inlined_call_operand.hbm [shape: f32[12,64], index: 2, kind: output, shape index: {}]
  %s3 = sld [smem:[#allocation0]]
  $region26: #{tpu_custom_call.1} parent=0
    _
  %s5 = ssub.s32 1, %s3
  %s6 = scalar_select 0, %s5, %s3
  $region1: #{tpu_custom_call.1} parent=0
    #allocation2 [shape = 'u8[512]{0}', space=vmem, size = 0x400, scoped, tag = 'input window, operand 0, single buffered']
    #allocation3 [shape = 's32[1]{0}', space=sflag, size = 0x4, scoped, tag = 'scoped memory for tpu_custom_call.1']
    #allocation4 [shape = 's32[1]{0}', space=sflag, size = 0x4, scoped, tag = 'scoped memory for tpu_custom_call.1']
    #allocation5 [shape = 'u8[8192]{0}', space=vmem, size = 0x2000, scoped, tag = 'input window, operand 1, single buffered']
    #allocation6 [shape = 's32[1]{0}', space=sflag, size = 0x4, scoped, tag = 'scoped memory for tpu_custom_call.1']
    #allocation7 [shape = 'u8[8192]{0}', space=vmem, size = 0x2000, scoped, tag = 'output window, operand 0, single buffered']
    %7 = vsyncpa [#allocation3], 0
    %8 = vsyncpa [#allocation6], 0
    %9 = vsyncpa [#allocation4], 0
    // Predicated region
    $region2: #{tpu_custom_call.1} parent=1 // pred_check
      _
    $region3: #{tpu_custom_call.1} parent=1 // pred_check_branch
      %11 = sbr.rel (0) target = $region5
    $region4: #{tpu_custom_call.1} parent=1 // pred_region
      %s13 = ssub.s32 16, 16
      %14 = vsyncadd [#allocation3], %s13
      %s16 = sshll.u32 [#allocation2], 4
      %s17 = int_to_ptr.vmem [resolvable:$true] %s16
      %19 = dma.hbm_to_vmem [thread:$0]  %s0, 16, %s17, [#allocation3]
    $region5: #{tpu_custom_call.1} parent=1 // pred_fallthru
      _
    // Predicated region
    $region6: #{tpu_custom_call.1} parent=1 // pred_check
      _
    $region7: #{tpu_custom_call.1} parent=1 // pred_check_branch
      %21 = sbr.rel (0) target = $region9
    $region8: #{tpu_custom_call.1} parent=1 // pred_region
      %s23 = ssub.s32 256, 256
      %24 = vsyncadd [#allocation6], %s23
      %s25 = sshll.u32 [#allocation5], 4
      %s26 = int_to_ptr.vmem [resolvable:$true] %s25
      %31 = dma.hbm_to_vmem [thread:$0]  %s1, 256, %s26, [#allocation6], 128, 128, 8
    $region9: #{tpu_custom_call.1} parent=1 // pred_fallthru
      _
    // Predicated region
    $region10: #{tpu_custom_call.1} parent=1 // pred_check
      _
    $region11: #{tpu_custom_call.1} parent=1 // pred_check_branch
      %33 = sbr.rel (0) target = $region13
    $region12: #{tpu_custom_call.1} parent=1 // pred_region
      %34 = dma.done [#allocation3], 16
    $region13: #{tpu_custom_call.1} parent=1 // pred_fallthru
      _
    // Predicated region
    $region14: #{tpu_custom_call.1} parent=1 // pred_check
      _
    $region15: #{tpu_custom_call.1} parent=1 // pred_check_branch
      %36 = sbr.rel (0) target = $region17
    $region16: #{tpu_custom_call.1} parent=1 // pred_region
      %37 = dma.done [#allocation6], 256
    $region17: #{tpu_custom_call.1} parent=1 // pred_fallthru
      _
    %v38 = vld [vmem:[#allocation2] sm:$0x1]
    %vm39 = vcmp.lt.s32.totalorder %v38, 0
    %v40 = vsel %vm39, 1, 0
    %v41 = vmul.u32 %v40, 16
    %v42 = vsub.s32 0, %v38
    %v43 = vsel %vm39, %v42, %v38
    %vm44 = vcmp.lt.s32.totalorder %v43, 8
    %vm45 = vcmp.gt.s32.totalorder %v43, 1
    %v46 = vsel %vm45, %v43, 1
    %v47 = vcvt.s32.f32 %v46
    %v48 = vrcp.pop 8.0
    %v49 = vmul.f32 %v47, %v48
    %v50 = vlog2.pop %v49
    %v51 = vmul.f32 %v50, 0.6931472
    %v52 = vrcp.pop 2.7725887
    %v53 = vmul.f32 %v51, %v52
    %v54 = vmul.f32 %v53, 8.0
    %v55 = vcvt.f32.s32.to.zero.pseudo %v54
    %v56 = vadd.s32 %v55, 8
    %vm57 = vcmp.lt.s32.totalorder %v56, 15
    %v58 = vsel %vm57, %v56, 15
    %v59 = vsel %vm44, %v43, %v58
    %v60 = vadd.s32 %v41, %v59
    %v61 = vlaneseq
    %v62 = vshrl.u32 %v61, 7
    %v63 = vadd.s32 %v62, 8
    %v64 = vadd.s32 %v62, 16
    %v65 = vadd.s32 %v62, 24
    %v66 = vlaneseq
    %v67 = vshrl.u32 %v66, 7
    %v68 = vsub.s32 0, %v67
    %v69 = vrot.slane %v60, %v68
    %vm70 = vcmp.eq.s32.totalorder %v62, %v69
    %vm71 = vcmp.eq.s32.totalorder %v63, %v69
    %vm72 = vcmp.eq.s32.totalorder %v64, %v69
    %vm73 = vcmp.eq.s32.totalorder %v65, %v69
    %v74 = vsel %vm70, 1, 0
    %v75 = vsel %vm71, 1, 0
    %v76 = vsel %vm72, 1, 0
    %v77 = vsel %vm73, 1, 0
    %v78 = vcvt.s32.f32 %v74
    %v79 = vcvt.s32.f32 %v75
    %v80 = vcvt.s32.f32 %v76
    %v81 = vcvt.s32.f32 %v77
    %v82 = vld [vmem:[#allocation5] sm:$0xff]
    %v83 = vld [vmem:[#allocation5 + $0x8] sm:$0xf]
    %vm84 = vcmask 261120
    %v86 = vsel %vm84, %v82, 0
    %v89 = vsel %vm84, %v83, 0
    %91 = vmatprep.subr.mxu0 0.0
    %92 = vmatpush1.msra.mxu0 0.0
    %93 = vmatprep.subr.mxu0 0.0
    %94 = vmatpush1.msra.mxu0 0.0
    %95 = vmatprep.subr.mxu0 0.0
    %96 = vmatpush1.msra.mxu0 0.0
    %97 = vmatprep.subr.mxu0 0.0
    %98 = vmatpush1.msra.mxu0 0.0
    %99 = vmatprep.subr.mxu0 0.0
    %100 = vmatpush1.msra.mxu0 0.0
    %101 = vmatprep.subr.mxu0 0.0
    %102 = vmatpush1.msra.mxu0 0.0
    %103 = vmatprep.subr.mxu0 0.0
    %104 = vmatpush1.msra.mxu0 0.0
    %105 = vmatprep.subr.mxu0 0.0
    %106 = vmatpush1.msra.mxu0 0.0
    %107 = vmatprep.subr.mxu0 0.0
    %108 = vmatpush1.msra.mxu0 0.0
    %109 = vmatprep.subr.mxu0 0.0
    %110 = vmatpush1.msra.mxu0 0.0
    %111 = vmatprep.subr.mxu0 0.0
    %112 = vmatpush1.msra.mxu0 0.0
    %113 = vmatprep.subr.mxu0 0.0
    %114 = vmatpush1.msra.mxu0 0.0
    %115 = vmatprep.subr.mxu0 0.0
    %v116 = vand.u32 %v81, 4294901760
    %117 = vmatpush1.msra.mxu0 %v116
    %118 = vmatprep.subr.mxu0 0.0
    %v119 = vand.u32 %v80, 4294901760
    %120 = vmatpush1.msra.mxu0 %v119
    %121 = vmatprep.subr.mxu0 0.0
    %v122 = vand.u32 %v79, 4294901760
    %123 = vmatpush1.msra.mxu0 %v122
    %124 = vmatprep.subr.mxu0 0.0
    %v125 = vand.u32 %v78, 4294901760
    %126 = vmatpush1.msra.mxu0 %v125
    %127 = vmatprep.subr.mxu0 0.0
    %128 = vmatpush2.msra.mxu0 0.0
    %129 = vmatprep.subr.mxu0 0.0
    %130 = vmatpush2.msra.mxu0 0.0
    %131 = vmatprep.subr.mxu0 0.0
    %132 = vmatpush2.msra.mxu0 0.0
    %133 = vmatprep.subr.mxu0 0.0
    %134 = vmatpush2.msra.mxu0 0.0
    %135 = vmatprep.subr.mxu0 0.0
    %136 = vmatpush2.msra.mxu0 0.0
    %137 = vmatprep.subr.mxu0 0.0
    %138 = vmatpush2.msra.mxu0 0.0
    %139 = vmatprep.subr.mxu0 0.0
    %140 = vmatpush2.msra.mxu0 0.0
    %141 = vmatprep.subr.mxu0 0.0
    %142 = vmatpush2.msra.mxu0 0.0
    %143 = vmatprep.subr.mxu0 0.0
    %144 = vmatpush2.msra.mxu0 0.0
    %145 = vmatprep.subr.mxu0 0.0
    %146 = vmatpush2.msra.mxu0 0.0
    %147 = vmatprep.subr.mxu0 0.0
    %148 = vmatpush2.msra.mxu0 0.0
    %149 = vmatprep.subr.mxu0 0.0
    %150 = vmatpush2.msra.mxu0 0.0
    %151 = vmatprep.subr.mxu0 0.0
    %152 = vmatpush2.msra.mxu0 0.0
    %153 = vmatprep.subr.mxu0 0.0
    %154 = vmatpush2.msra.mxu0 0.0
    %155 = vmatprep.subr.mxu0 0.0
    %156 = vmatpush2.msra.mxu0 0.0
    %157 = vmatprep.subr.mxu0 0.0
    %158 = vmatpush2.msra.mxu0 0.0
    %159 = vmatprep.mubr.f32.mxu0 0.0
    %v160 = vand.u32 %v86, 4294901760
    %v161 = vsub.f32 %v86, %v160
    %v162 = vand.u32 %v161, 4294901760
    %v163 = vsub.f32 %v161, %v162
    %v164 = vand.u32 %v163, 4294901760
    %165 = vmatmul.mubr.f32.gmra.mxu0 %v164
    %v166 = vpop.f32.mrf.mxu0
    %v167 = vadd.f32 0.0, %v166
    %v168 = vpop.f32.mrf.mxu0
    %169 = vmatprep.mubr.f32.mxu0 0.0
    %v170 = vand.u32 %v89, 4294901760
    %v171 = vsub.f32 %v89, %v170
    %v172 = vand.u32 %v171, 4294901760
    %v173 = vsub.f32 %v171, %v172
    %v174 = vand.u32 %v173, 4294901760
    %175 = vmatmul.mubr.f32.gmra.mxu0 %v174
    %v176 = vpop.f32.mrf.mxu0
    %v177 = vadd.f32 0.0, %v176
    %v178 = vpop.f32.mrf.mxu0
    %179 = vdwg.mxu0
    %180 = vmatprep.subr.mxu0 0.0
    %181 = vmatpush1.msra.mxu0 0.0
    %182 = vmatprep.subr.mxu0 0.0
    %183 = vmatpush1.msra.mxu0 0.0
    %184 = vmatprep.subr.mxu0 0.0
    %185 = vmatpush1.msra.mxu0 0.0
    %186 = vmatprep.subr.mxu0 0.0
    %187 = vmatpush1.msra.mxu0 0.0
    %188 = vmatprep.subr.mxu0 0.0
    %189 = vmatpush1.msra.mxu0 0.0
    %190 = vmatprep.subr.mxu0 0.0
    %191 = vmatpush1.msra.mxu0 0.0
    %192 = vmatprep.subr.mxu0 0.0
    %193 = vmatpush1.msra.mxu0 0.0
    %194 = vmatprep.subr.mxu0 0.0
    %195 = vmatpush1.msra.mxu0 0.0
    %196 = vmatprep.subr.mxu0 0.0
    %197 = vmatpush1.msra.mxu0 0.0
    %198 = vmatprep.subr.mxu0 0.0
    %199 = vmatpush1.msra.mxu0 0.0
    %200 = vmatprep.subr.mxu0 0.0
    %201 = vmatpush1.msra.mxu0 0.0
    %202 = vmatprep.subr.mxu0 0.0
    %203 = vmatpush1.msra.mxu0 0.0
    %204 = vmatprep.subr.mxu0 0.0
    %v205 = vand.u32 %v81, 4294901760
    %v206 = vsub.f32 %v81, %v205
    %v207 = vand.u32 %v206, 4294901760
    %v208 = vsub.f32 %v206, %v207
    %v209 = vand.u32 %v208, 4294901760
    %210 = vmatpush1.msra.mxu0 %v209
    %211 = vmatprep.subr.mxu0 0.0
    %v212 = vand.u32 %v80, 4294901760
    %v213 = vsub.f32 %v80, %v212
    %v214 = vand.u32 %v213, 4294901760
    %v215 = vsub.f32 %v213, %v214
    %v216 = vand.u32 %v215, 4294901760
    %217 = vmatpush1.msra.mxu0 %v216
    %218 = vmatprep.subr.mxu0 0.0
    %v219 = vand.u32 %v79, 4294901760
    %v220 = vsub.f32 %v79, %v219
    %v221 = vand.u32 %v220, 4294901760
    %v222 = vsub.f32 %v220, %v221
    %v223 = vand.u32 %v222, 4294901760
    %224 = vmatpush1.msra.mxu0 %v223
    %225 = vmatprep.subr.mxu0 0.0
    %v226 = vand.u32 %v78, 4294901760
    %v227 = vsub.f32 %v78, %v226
    %v228 = vand.u32 %v227, 4294901760
    %v229 = vsub.f32 %v227, %v228
    %v230 = vand.u32 %v229, 4294901760
    %231 = vmatpush1.msra.mxu0 %v230
    %232 = vmatprep.subr.mxu0 0.0
    %233 = vmatpush2.msra.mxu0 0.0
    %234 = vmatprep.subr.mxu0 0.0
    %235 = vmatpush2.msra.mxu0 0.0
    %236 = vmatprep.subr.mxu0 0.0
    %237 = vmatpush2.msra.mxu0 0.0
    %238 = vmatprep.subr.mxu0 0.0
    %239 = vmatpush2.msra.mxu0 0.0
    %240 = vmatprep.subr.mxu0 0.0
    %241 = vmatpush2.msra.mxu0 0.0
    %242 = vmatprep.subr.mxu0 0.0
    %243 = vmatpush2.msra.mxu0 0.0
    %244 = vmatprep.subr.mxu0 0.0
    %245 = vmatpush2.msra.mxu0 0.0
    %246 = vmatprep.subr.mxu0 0.0
    %247 = vmatpush2.msra.mxu0 0.0
    %248 = vmatprep.subr.mxu0 0.0
    %249 = vmatpush2.msra.mxu0 0.0
    %250 = vmatprep.subr.mxu0 0.0
    %251 = vmatpush2.msra.mxu0 0.0
    %252 = vmatprep.subr.mxu0 0.0
    %253 = vmatpush2.msra.mxu0 0.0
    %254 = vmatprep.subr.mxu0 0.0
    %255 = vmatpush2.msra.mxu0 0.0
    %256 = vmatprep.subr.mxu0 0.0
    %257 = vmatpush2.msra.mxu0 0.0
    %258 = vmatprep.subr.mxu0 0.0
    %259 = vmatpush2.msra.mxu0 0.0
    %260 = vmatprep.subr.mxu0 0.0
    %261 = vmatpush2.msra.mxu0 0.0
    %262 = vmatprep.subr.mxu0 0.0
    %263 = vmatpush2.msra.mxu0 0.0
    %264 = vmatprep.mubr.f32.mxu0 0.0
    %v265 = vand.u32 %v86, 4294901760
    %266 = vmatmul.mubr.f32.gmra.mxu0 %v265
    %v267 = vpop.f32.mrf.mxu0
    %v268 = vadd.f32 %v167, %v267
    %v269 = vpop.f32.mrf.mxu0
    %270 = vmatprep.mubr.f32.mxu0 0.0
    %v271 = vand.u32 %v89, 4294901760
    %272 = vmatmul.mubr.f32.gmra.mxu0 %v271
    %v273 = vpop.f32.mrf.mxu0
    %v274 = vadd.f32 %v177, %v273
    %v275 = vpop.f32.mrf.mxu0
    %276 = vdwg.mxu0
    %277 = vmatprep.subr.mxu0 0.0
    %278 = vmatpush1.msra.mxu0 0.0
    %279 = vmatprep.subr.mxu0 0.0
    %280 = vmatpush1.msra.mxu0 0.0
    %281 = vmatprep.subr.mxu0 0.0
    %282 = vmatpush1.msra.mxu0 0.0
    %283 = vmatprep.subr.mxu0 0.0
    %284 = vmatpush1.msra.mxu0 0.0
    %285 = vmatprep.subr.mxu0 0.0
    %286 = vmatpush1.msra.mxu0 0.0
    %287 = vmatprep.subr.mxu0 0.0
    %288 = vmatpush1.msra.mxu0 0.0
    %289 = vmatprep.subr.mxu0 0.0
    %290 = vmatpush1.msra.mxu0 0.0
    %291 = vmatprep.subr.mxu0 0.0
    %292 = vmatpush1.msra.mxu0 0.0
    %293 = vmatprep.subr.mxu0 0.0
    %294 = vmatpush1.msra.mxu0 0.0
    %295 = vmatprep.subr.mxu0 0.0
    %296 = vmatpush1.msra.mxu0 0.0
    %297 = vmatprep.subr.mxu0 0.0
    %298 = vmatpush1.msra.mxu0 0.0
    %299 = vmatprep.subr.mxu0 0.0
    %300 = vmatpush1.msra.mxu0 0.0
    %301 = vmatprep.subr.mxu0 0.0
    %v302 = vand.u32 %v81, 4294901760
    %v303 = vsub.f32 %v81, %v302
    %304 = vmatpush1.msra.mxu0 %v303
    %305 = vmatprep.subr.mxu0 0.0
    %v306 = vand.u32 %v80, 4294901760
    %v307 = vsub.f32 %v80, %v306
    %308 = vmatpush1.msra.mxu0 %v307
    %309 = vmatprep.subr.mxu0 0.0
    %v310 = vand.u32 %v79, 4294901760
    %v311 = vsub.f32 %v79, %v310
    %312 = vmatpush1.msra.mxu0 %v311
    %313 = vmatprep.subr.mxu0 0.0
    %v314 = vand.u32 %v78, 4294901760
    %v315 = vsub.f32 %v78, %v314
    %316 = vmatpush1.msra.mxu0 %v315
    %317 = vmatprep.subr.mxu0 0.0
    %318 = vmatpush2.msra.mxu0 0.0
    %319 = vmatprep.subr.mxu0 0.0
    %320 = vmatpush2.msra.mxu0 0.0
    %321 = vmatprep.subr.mxu0 0.0
    %322 = vmatpush2.msra.mxu0 0.0
    %323 = vmatprep.subr.mxu0 0.0
    %324 = vmatpush2.msra.mxu0 0.0
    %325 = vmatprep.subr.mxu0 0.0
    %326 = vmatpush2.msra.mxu0 0.0
    %327 = vmatprep.subr.mxu0 0.0
    %328 = vmatpush2.msra.mxu0 0.0
    %329 = vmatprep.subr.mxu0 0.0
    %330 = vmatpush2.msra.mxu0 0.0
    %331 = vmatprep.subr.mxu0 0.0
    %332 = vmatpush2.msra.mxu0 0.0
    %333 = vmatprep.subr.mxu0 0.0
    %334 = vmatpush2.msra.mxu0 0.0
    %335 = vmatprep.subr.mxu0 0.0
    %336 = vmatpush2.msra.mxu0 0.0
    %337 = vmatprep.subr.mxu0 0.0
    %338 = vmatpush2.msra.mxu0 0.0
    %339 = vmatprep.subr.mxu0 0.0
    %340 = vmatpush2.msra.mxu0 0.0
    %341 = vmatprep.subr.mxu0 0.0
    %342 = vmatpush2.msra.mxu0 0.0
    %343 = vmatprep.subr.mxu0 0.0
    %344 = vmatpush2.msra.mxu0 0.0
    %345 = vmatprep.subr.mxu0 0.0
    %346 = vmatpush2.msra.mxu0 0.0
    %347 = vmatprep.subr.mxu0 0.0
    %348 = vmatpush2.msra.mxu0 0.0
    %349 = vmatprep.mubr.f32.mxu0 0.0
    %v350 = vand.u32 %v86, 4294901760
    %v351 = vsub.f32 %v86, %v350
    %352 = vmatmul.mubr.f32.gmra.mxu0 %v351
    %v353 = vpop.f32.mrf.mxu0
    %v354 = vadd.f32 %v268, %v353
    %v355 = vpop.f32.mrf.mxu0
    %356 = vmatprep.mubr.f32.mxu0 0.0
    %v357 = vand.u32 %v89, 4294901760
    %v358 = vsub.f32 %v89, %v357
    %359 = vmatmul.mubr.f32.gmra.mxu0 %v358
    %v360 = vpop.f32.mrf.mxu0
    %v361 = vadd.f32 %v274, %v360
    %v362 = vpop.f32.mrf.mxu0
    %363 = vdwg.mxu0
    %364 = vmatprep.subr.mxu0 0.0
    %365 = vmatpush1.msra.mxu0 0.0
    %366 = vmatprep.subr.mxu0 0.0
    %367 = vmatpush1.msra.mxu0 0.0
    %368 = vmatprep.subr.mxu0 0.0
    %369 = vmatpush1.msra.mxu0 0.0
    %370 = vmatprep.subr.mxu0 0.0
    %371 = vmatpush1.msra.mxu0 0.0
    %372 = vmatprep.subr.mxu0 0.0
    %373 = vmatpush1.msra.mxu0 0.0
    %374 = vmatprep.subr.mxu0 0.0
    %375 = vmatpush1.msra.mxu0 0.0
    %376 = vmatprep.subr.mxu0 0.0
    %377 = vmatpush1.msra.mxu0 0.0
    %378 = vmatprep.subr.mxu0 0.0
    %379 = vmatpush1.msra.mxu0 0.0
    %380 = vmatprep.subr.mxu0 0.0
    %381 = vmatpush1.msra.mxu0 0.0
    %382 = vmatprep.subr.mxu0 0.0
    %383 = vmatpush1.msra.mxu0 0.0
    %384 = vmatprep.subr.mxu0 0.0
    %385 = vmatpush1.msra.mxu0 0.0
    %386 = vmatprep.subr.mxu0 0.0
    %387 = vmatpush1.msra.mxu0 0.0
    %388 = vmatprep.subr.mxu0 0.0
    %v389 = vand.u32 %v81, 4294901760
    %390 = vmatpush1.msra.mxu0 %v389
    %391 = vmatprep.subr.mxu0 0.0
    %v392 = vand.u32 %v80, 4294901760
    %393 = vmatpush1.msra.mxu0 %v392
    %394 = vmatprep.subr.mxu0 0.0
    %v395 = vand.u32 %v79, 4294901760
    %396 = vmatpush1.msra.mxu0 %v395
    %397 = vmatprep.subr.mxu0 0.0
    %v398 = vand.u32 %v78, 4294901760
    %399 = vmatpush1.msra.mxu0 %v398
    %400 = vmatprep.subr.mxu0 0.0
    %401 = vmatpush2.msra.mxu0 0.0
    %402 = vmatprep.subr.mxu0 0.0
    %403 = vmatpush2.msra.mxu0 0.0
    %404 = vmatprep.subr.mxu0 0.0
    %405 = vmatpush2.msra.mxu0 0.0
    %406 = vmatprep.subr.mxu0 0.0
    %407 = vmatpush2.msra.mxu0 0.0
    %408 = vmatprep.subr.mxu0 0.0
    %409 = vmatpush2.msra.mxu0 0.0
    %410 = vmatprep.subr.mxu0 0.0
    %411 = vmatpush2.msra.mxu0 0.0
    %412 = vmatprep.subr.mxu0 0.0
    %413 = vmatpush2.msra.mxu0 0.0
    %414 = vmatprep.subr.mxu0 0.0
    %415 = vmatpush2.msra.mxu0 0.0
    %416 = vmatprep.subr.mxu0 0.0
    %417 = vmatpush2.msra.mxu0 0.0
    %418 = vmatprep.subr.mxu0 0.0
    %419 = vmatpush2.msra.mxu0 0.0
    %420 = vmatprep.subr.mxu0 0.0
    %421 = vmatpush2.msra.mxu0 0.0
    %422 = vmatprep.subr.mxu0 0.0
    %423 = vmatpush2.msra.mxu0 0.0
    %424 = vmatprep.subr.mxu0 0.0
    %425 = vmatpush2.msra.mxu0 0.0
    %426 = vmatprep.subr.mxu0 0.0
    %427 = vmatpush2.msra.mxu0 0.0
    %428 = vmatprep.subr.mxu0 0.0
    %429 = vmatpush2.msra.mxu0 0.0
    %430 = vmatprep.subr.mxu0 0.0
    %431 = vmatpush2.msra.mxu0 0.0
    %432 = vmatprep.mubr.f32.mxu0 0.0
    %v433 = vand.u32 %v86, 4294901760
    %v434 = vsub.f32 %v86, %v433
    %v435 = vand.u32 %v434, 4294901760
    %436 = vmatmul.mubr.f32.gmra.mxu0 %v435
    %v437 = vpop.f32.mrf.mxu0
    %v438 = vadd.f32 %v354, %v437
    %v439 = vpop.f32.mrf.mxu0
    %440 = vmatprep.mubr.f32.mxu0 0.0
    %v441 = vand.u32 %v89, 4294901760
    %v442 = vsub.f32 %v89, %v441
    %v443 = vand.u32 %v442, 4294901760
    %444 = vmatmul.mubr.f32.gmra.mxu0 %v443
    %v445 = vpop.f32.mrf.mxu0
    %v446 = vadd.f32 %v361, %v445
    %v447 = vpop.f32.mrf.mxu0
    %448 = vdwg.mxu0
    %449 = vmatprep.subr.mxu0 0.0
    %450 = vmatpush1.msra.mxu0 0.0
    %451 = vmatprep.subr.mxu0 0.0
    %452 = vmatpush1.msra.mxu0 0.0
    %453 = vmatprep.subr.mxu0 0.0
    %454 = vmatpush1.msra.mxu0 0.0
    %455 = vmatprep.subr.mxu0 0.0
    %456 = vmatpush1.msra.mxu0 0.0
    %457 = vmatprep.subr.mxu0 0.0
    %458 = vmatpush1.msra.mxu0 0.0
    %459 = vmatprep.subr.mxu0 0.0
    %460 = vmatpush1.msra.mxu0 0.0
    %461 = vmatprep.subr.mxu0 0.0
    %462 = vmatpush1.msra.mxu0 0.0
    %463 = vmatprep.subr.mxu0 0.0
    %464 = vmatpush1.msra.mxu0 0.0
    %465 = vmatprep.subr.mxu0 0.0
    %466 = vmatpush1.msra.mxu0 0.0
    %467 = vmatprep.subr.mxu0 0.0
    %468 = vmatpush1.msra.mxu0 0.0
    %469 = vmatprep.subr.mxu0 0.0
    %470 = vmatpush1.msra.mxu0 0.0
    %471 = vmatprep.subr.mxu0 0.0
    %472 = vmatpush1.msra.mxu0 0.0
    %473 = vmatprep.subr.mxu0 0.0
    %v474 = vand.u32 %v81, 4294901760
    %v475 = vsub.f32 %v81, %v474
    %v476 = vand.u32 %v475, 4294901760
    %477 = vmatpush1.msra.mxu0 %v476
    %478 = vmatprep.subr.mxu0 0.0
    %v479 = vand.u32 %v80, 4294901760
    %v480 = vsub.f32 %v80, %v479
    %v481 = vand.u32 %v480, 4294901760
    %482 = vmatpush1.msra.mxu0 %v481
    %483 = vmatprep.subr.mxu0 0.0
    %v484 = vand.u32 %v79, 4294901760
    %v485 = vsub.f32 %v79, %v484
    %v486 = vand.u32 %v485, 4294901760
    %487 = vmatpush1.msra.mxu0 %v486
    %488 = vmatprep.subr.mxu0 0.0
    %v489 = vand.u32 %v78, 4294901760
    %v490 = vsub.f32 %v78, %v489
    %v491 = vand.u32 %v490, 4294901760
    %492 = vmatpush1.msra.mxu0 %v491
    %493 = vmatprep.subr.mxu0 0.0
    %494 = vmatpush2.msra.mxu0 0.0
    %495 = vmatprep.subr.mxu0 0.0
    %496 = vmatpush2.msra.mxu0 0.0
    %497 = vmatprep.subr.mxu0 0.0
    %498 = vmatpush2.msra.mxu0 0.0
    %499 = vmatprep.subr.mxu0 0.0
    %500 = vmatpush2.msra.mxu0 0.0
    %501 = vmatprep.subr.mxu0 0.0
    %502 = vmatpush2.msra.mxu0 0.0
    %503 = vmatprep.subr.mxu0 0.0
    %504 = vmatpush2.msra.mxu0 0.0
    %505 = vmatprep.subr.mxu0 0.0
    %506 = vmatpush2.msra.mxu0 0.0
    %507 = vmatprep.subr.mxu0 0.0
    %508 = vmatpush2.msra.mxu0 0.0
    %509 = vmatprep.subr.mxu0 0.0
    %510 = vmatpush2.msra.mxu0 0.0
    %511 = vmatprep.subr.mxu0 0.0
    %512 = vmatpush2.msra.mxu0 0.0
    %513 = vmatprep.subr.mxu0 0.0
    %514 = vmatpush2.msra.mxu0 0.0
    %515 = vmatprep.subr.mxu0 0.0
    %516 = vmatpush2.msra.mxu0 0.0
    %517 = vmatprep.subr.mxu0 0.0
    %518 = vmatpush2.msra.mxu0 0.0
    %519 = vmatprep.subr.mxu0 0.0
    %520 = vmatpush2.msra.mxu0 0.0
    %521 = vmatprep.subr.mxu0 0.0
    %522 = vmatpush2.msra.mxu0 0.0
    %523 = vmatprep.subr.mxu0 0.0
    %524 = vmatpush2.msra.mxu0 0.0
    %525 = vmatprep.mubr.f32.mxu0 0.0
    %v526 = vand.u32 %v86, 4294901760
    %527 = vmatmul.mubr.f32.gmra.mxu0 %v526
    %v528 = vpop.f32.mrf.mxu0
    %v529 = vadd.f32 %v438, %v528
    %v530 = vpop.f32.mrf.mxu0
    %531 = vmatprep.mubr.f32.mxu0 0.0
    %v532 = vand.u32 %v89, 4294901760
    %533 = vmatmul.mubr.f32.gmra.mxu0 %v532
    %v534 = vpop.f32.mrf.mxu0
    %v535 = vadd.f32 %v446, %v534
    %v536 = vpop.f32.mrf.mxu0
    %537 = vdwg.mxu0
    %538 = vmatprep.subr.mxu0 0.0
    %539 = vmatpush1.msra.mxu0 0.0
    %540 = vmatprep.subr.mxu0 0.0
    %541 = vmatpush1.msra.mxu0 0.0
    %542 = vmatprep.subr.mxu0 0.0
    %543 = vmatpush1.msra.mxu0 0.0
    %544 = vmatprep.subr.mxu0 0.0
    %545 = vmatpush1.msra.mxu0 0.0
    %546 = vmatprep.subr.mxu0 0.0
    %547 = vmatpush1.msra.mxu0 0.0
    %548 = vmatprep.subr.mxu0 0.0
    %549 = vmatpush1.msra.mxu0 0.0
    %550 = vmatprep.subr.mxu0 0.0
    %551 = vmatpush1.msra.mxu0 0.0
    %552 = vmatprep.subr.mxu0 0.0
    %553 = vmatpush1.msra.mxu0 0.0
    %554 = vmatprep.subr.mxu0 0.0
    %555 = vmatpush1.msra.mxu0 0.0
    %556 = vmatprep.subr.mxu0 0.0
    %557 = vmatpush1.msra.mxu0 0.0
    %558 = vmatprep.subr.mxu0 0.0
    %559 = vmatpush1.msra.mxu0 0.0
    %560 = vmatprep.subr.mxu0 0.0
    %561 = vmatpush1.msra.mxu0 0.0
    %562 = vmatprep.subr.mxu0 0.0
    %v563 = vand.u32 %v81, 4294901760
    %564 = vmatpush1.msra.mxu0 %v563
    %565 = vmatprep.subr.mxu0 0.0
    %v566 = vand.u32 %v80, 4294901760
    %567 = vmatpush1.msra.mxu0 %v566
    %568 = vmatprep.subr.mxu0 0.0
    %v569 = vand.u32 %v79, 4294901760
    %570 = vmatpush1.msra.mxu0 %v569
    %571 = vmatprep.subr.mxu0 0.0
    %v572 = vand.u32 %v78, 4294901760
    %573 = vmatpush1.msra.mxu0 %v572
    %574 = vmatprep.subr.mxu0 0.0
    %575 = vmatpush2.msra.mxu0 0.0
    %576 = vmatprep.subr.mxu0 0.0
    %577 = vmatpush2.msra.mxu0 0.0
    %578 = vmatprep.subr.mxu0 0.0
    %579 = vmatpush2.msra.mxu0 0.0
    %580 = vmatprep.subr.mxu0 0.0
    %581 = vmatpush2.msra.mxu0 0.0
    %582 = vmatprep.subr.mxu0 0.0
    %583 = vmatpush2.msra.mxu0 0.0
    %584 = vmatprep.subr.mxu0 0.0
    %585 = vmatpush2.msra.mxu0 0.0
    %586 = vmatprep.subr.mxu0 0.0
    %587 = vmatpush2.msra.mxu0 0.0
    %588 = vmatprep.subr.mxu0 0.0
    %589 = vmatpush2.msra.mxu0 0.0
    %590 = vmatprep.subr.mxu0 0.0
    %591 = vmatpush2.msra.mxu0 0.0
    %592 = vmatprep.subr.mxu0 0.0
    %593 = vmatpush2.msra.mxu0 0.0
    %594 = vmatprep.subr.mxu0 0.0
    %595 = vmatpush2.msra.mxu0 0.0
    %596 = vmatprep.subr.mxu0 0.0
    %597 = vmatpush2.msra.mxu0 0.0
    %598 = vmatprep.subr.mxu0 0.0
    %599 = vmatpush2.msra.mxu0 0.0
    %600 = vmatprep.subr.mxu0 0.0
    %601 = vmatpush2.msra.mxu0 0.0
    %602 = vmatprep.subr.mxu0 0.0
    %603 = vmatpush2.msra.mxu0 0.0
    %604 = vmatprep.subr.mxu0 0.0
    %605 = vmatpush2.msra.mxu0 0.0
    %606 = vmatprep.mubr.f32.mxu0 0.0
    %v607 = vand.u32 %v86, 4294901760
    %608 = vmatmul.mubr.f32.gmra.mxu0 %v607
    %v609 = vpop.f32.mrf.mxu0
    %v610 = vadd.f32 %v529, %v609
    %v611 = vpop.f32.mrf.mxu0
    %612 = vmatprep.mubr.f32.mxu0 0.0
    %v613 = vand.u32 %v89, 4294901760
    %614 = vmatmul.mubr.f32.gmra.mxu0 %v613
    %v615 = vpop.f32.mrf.mxu0
    %v616 = vadd.f32 %v535, %v615
    %v617 = vpop.f32.mrf.mxu0
    %618 = vdwg.mxu0
    %vm619 = vcmask 523264
    %620 = vst.msk [vmem:[#allocation7] sm:$0xff] %vm619, %v610
    %vm621 = vcmask 519168
    %622 = vst.msk [vmem:[#allocation7 + $0x8] sm:$0xf] %vm621, %v616
    // Predicated region
    $region18: #{tpu_custom_call.1} parent=1 // pred_check
      _
    $region19: #{tpu_custom_call.1} parent=1 // pred_check_branch
      %624 = sbr.rel (0) target = $region21
    $region20: #{tpu_custom_call.1} parent=1 // pred_region
      %s626 = ssub.s32 256, 256
      %627 = vsyncadd [#allocation4], %s626
      %s628 = sshll.u32 [#allocation7], 4
      %s629 = int_to_ptr.vmem [resolvable:$true] %s628
      %634 = dma.vmem_to_hbm [thread:$0]  %s629, 256, %s2, [#allocation4], 128, 128, 8
    $region21: #{tpu_custom_call.1} parent=1 // pred_fallthru
      _
    // Predicated region
    $region22: #{tpu_custom_call.1} parent=1 // pred_check
      _
    $region23: #{tpu_custom_call.1} parent=1 // pred_check_branch
      %636 = sbr.rel (0) target = $region25
    $region24: #{tpu_custom_call.1} parent=1 // pred_region
      %637 = dma.done [#allocation4], 256
    $region25: #{tpu_custom_call.1} parent=1 // pred_fallthru
      _
    %638 = vsyncpa [#allocation3], 1
    %639 = vsyncpa [#allocation6], 1
    %640 = vsyncpa [#allocation4], 1

</llo_original>
